<compile_context>
chip_gen: v6e
topology: v6e:2x2x1
jax: 0.10.0
libtpu: 0.0.40
codegen_flags: <defaults>
</compile_context>

<pallas_src>
import functools

import numpy as np
import jax
import jax.numpy as jnp
from jax.experimental import pallas as pl
from jax.experimental.pallas import tpu as pltpu


def _spatial_attention_kernel(b_ref, wtab_ref, x_ref, o_ref, *, W, HW_pad):
    # b_ref    : SMEM f32[1]              conv bias
    # wtab_ref : VMEM f32[9, HW_pad]      tap_weight/C * validity_mask per tap
    # x_ref    : VMEM     [TB, C, HW_pad] input block
    # o_ref    : VMEM     [TB, C, HW_pad] output block
    # Channel sum accumulated in f32 (the 1/C is folded into wtab).
    ssum = jnp.sum(x_ref[...].astype(jnp.float32), axis=1)        # (TB, HW_pad)

    # 3x3 conv (padding=1) as 9 circular rolls of the flat sum, each masked
    # and scaled by the precomputed per-tap weight*mask table.  For in-bounds
    # taps the flat offset never wraps, so the circular roll + mask is exact.
    acc = jnp.full(ssum.shape, b_ref[0], dtype=jnp.float32)
    for dh in (-1, 0, 1):
        for dw in (-1, 0, 1):
            k = (dh + 1) * 3 + (dw + 1)
            s = dh * W + dw                                       # flat tap offset
            tap = ssum if s == 0 else pltpu.roll(ssum, shift=(-s) % HW_pad, axis=1)
            acc = acc + wtab_ref[k:k + 1, :] * tap

    y = jax.nn.sigmoid(acc)                                       # (TB, HW_pad) f32
    # Multiply/store in the input dtype (bf16 inputs stay bf16 on the bulk path).
    o_ref[...] = x_ref[...] * y.astype(o_ref.dtype)[:, None, :]


@jax.jit
def spatial_attention(x, weight, bias):
    """x: (B, C, H, W); weight: (1, 2, 3, 3); bias: (1,)."""
    B, C, H, W = x.shape
    HW = H * W
    HW_pad = max(128, ((HW + 127) // 128) * 128)    # lane-dense (multiple of 128)

    x_flat = x.reshape(B, C, HW)
    if HW_pad != HW:
        x_flat = jnp.pad(x_flat, ((0, 0), (0, 0), (0, HW_pad - HW)))

    # Fold the duplicated conv input channel and the 1/C of the channel mean
    # into 9 effective tap weights; premultiply by the per-tap border masks
    # (handles top/bottom/left/right edges and the flat-layout column wrap;
    # positions >= HW are the lane padding and are masked off too).
    w_eff = ((weight[0, 0] + weight[0, 1]).astype(jnp.float32) / C).reshape(9, 1)
    p = np.arange(HW_pad)
    hh, ww = p // W, p % W
    inb = p < HW
    masks = np.stack([
        inb & (hh + dh >= 0) & (hh + dh < H) & (ww + dw >= 0) & (ww + dw < W)
        for dh in (-1, 0, 1) for dw in (-1, 0, 1)
    ]).astype(np.float32)                                          # (9, HW_pad)
    wtab = w_eff * jnp.asarray(masks)                              # (9, HW_pad)
    b_flat = bias.reshape(-1).astype(jnp.float32)                  # (1,)

    # Block selection: target ~3 MiB of input per grid step, but keep the
    # grid >= ~4 steps (2 TCs on v7x * pipeline depth) when B allows it.
    itemsize = x.dtype.itemsize
    per_batch_bytes = C * HW_pad * itemsize
    target_block_bytes = 3 << 20
    tb = max(1, min(B, target_block_bytes // max(per_batch_bytes, 1)))
    tb = min(tb, max(1, B // min(B, 4)))
    while B % tb:          # largest divisor of B not above tb (perf only)
        tb -= 1
    # If a single batch exceeds the target (huge C*H*W), tb=1 and the block is
    # one full batch; vmem_limit below is sized for it.  Batches larger than
    # ~12 MiB would need an HW-split grid axis with a row halo.

    block_bytes = tb * per_batch_bytes
    vmem_need = 4 * block_bytes + 2 * (wtab.size * 4) + (2 << 20)
    vmem_limit = int(min(max(vmem_need, 32 << 20), 100 << 20))

    grid = (B // tb,)
    kernel = functools.partial(_spatial_attention_kernel, W=W, HW_pad=HW_pad)
    out_flat = pl.pallas_call(
        kernel,
        out_shape=jax.ShapeDtypeStruct((B, C, HW_pad), x.dtype),
        grid=grid,
        in_specs=[
            pl.BlockSpec(memory_space=pltpu.MemorySpace.SMEM),        # bias (1,)
            pl.BlockSpec((9, HW_pad), lambda i: (0, 0)),              # weight*mask table
            pl.BlockSpec((tb, C, HW_pad), lambda i: (i, 0, 0)),       # x
        ],
        out_specs=pl.BlockSpec((tb, C, HW_pad), lambda i: (i, 0, 0)),
        compiler_params=pltpu.CompilerParams(
            dimension_semantics=("parallel",),
            vmem_limit_bytes=vmem_limit),
        cost_estimate=pl.CostEstimate(
            flops=int(B * HW * (2 * C + 18)),
            transcendentals=int(B * HW),
            bytes_accessed=int(2 * B * C * HW * itemsize)),
    )(b_flat, wtab, x_flat)

    out = out_flat[:, :, :HW] if HW_pad != HW else out_flat
    return out.reshape(B, C, H, W)


def _reference(x, weight, bias):
    mean = jnp.mean(x, axis=1, keepdims=True)
    y = jnp.concatenate([mean, mean], axis=1)
    y = jax.lax.conv_general_dilated(
        y, weight, window_strides=(1, 1), padding=((1, 1), (1, 1)),
        dimension_numbers=("NCHW", "OIHW", "NCHW"))
    y = y + bias.reshape(1, 1, 1, 1)
    return x * jax.nn.sigmoid(y)


if __name__ == "__main__":
    key = jax.random.PRNGKey(0)
    kx, kw, kb = jax.random.split(key, 3)

    B, C, H, W = 2, 4, 16, 16
    x = jax.random.normal(kx, (B, C, H, W), dtype=jnp.float32)

    # Deterministic Conv2d(2, 1, 3, padding=1) parameter init (PyTorch-style
    # uniform(-k, k) with k = 1/sqrt(fan_in), fan_in = 2*3*3).
    fan_in = 2 * 3 * 3
    k = 1.0 / jnp.sqrt(jnp.float32(fan_in))
    conv_w = jax.random.uniform(kw, (1, 2, 3, 3), jnp.float32, -k, k)
    conv_b = jax.random.uniform(kb, (1,), jnp.float32, -k, k)

    out = spatial_attention(x, conv_w, conv_b)
    out = jax.block_until_ready(out)

    ref = _reference(x, conv_w, conv_b)
    assert out.shape == (B, C, H, W)
    assert jnp.allclose(out, ref, atol=1e-5, rtol=1e-5), "mismatch vs reference"
    print("KERNEL_OK")
</pallas_src>

<mosaic_0001>
module attributes {stable_mosaic.version = 11 : i64} {
  func.func @_spatial_attention_kernel(%arg0: i32, %arg1: memref<1xf32, #tpu.memory_space<smem>>, %arg2: memref<9x256xf32, #tpu.memory_space<vmem>>, %arg3: memref<1x4x256xf32, #tpu.memory_space<vmem>>, %arg4: memref<1x4x256xf32, #tpu.memory_space<vmem>>) attributes {dimension_semantics = [#tpu.dimension_semantics<parallel>], iteration_bounds = array<i64: 2>, scalar_prefetch = 0 : i64, scratch_operands = 0 : i64, tpu.core_type = #tpu.core_type<tc>, window_params = [{transform_indices = @transform_0, window_bounds = array<i64: 1>}, {pipeline_mode = #tpu.pipeline_mode<synchronous>, transform_indices = @transform_1, window_bounds = array<i64: 9, 256>}, {transform_indices = @transform_2, window_bounds = array<i64: 1, 4, 256>}, {transform_indices = @transform_3, window_bounds = array<i64: 1, 4, 256>}]} {
    %c0 = arith.constant 0 : index
    %c0_0 = arith.constant 0 : index
    %c0_1 = arith.constant 0 : index
    %0 = vector.load %arg3[%c0, %c0_0, %c0_1] : memref<1x4x256xf32, #tpu.memory_space<vmem>>, vector<1x4x256xf32>
    %cst = arith.constant dense<0.000000e+00> : vector<1x256xf32>
    %1 = vector.multi_reduction <add>, %0, %cst [1] : vector<1x4x256xf32> to vector<1x256xf32>
    %c0_2 = arith.constant 0 : index
    %2 = memref.load %arg1[%c0_2] : memref<1xf32, #tpu.memory_space<smem>>
    %3 = vector.broadcast %2 : f32 to vector<1x256xf32>
    %c17_i32 = arith.constant 17 : i32
    %4 = tpu.dynamic_rotate %1 by %c17_i32 dim 1 : vector<1x256xf32>, i32 -> vector<1x256xf32>
    %c0_3 = arith.constant 0 : index
    %c0_4 = arith.constant 0 : index
    %5 = vector.load %arg2[%c0_3, %c0_4] : memref<9x256xf32, #tpu.memory_space<vmem>>, vector<1x256xf32>
    %6 = arith.mulf %5, %4 : vector<1x256xf32>
    %7 = arith.addf %3, %6 : vector<1x256xf32>
    %c16_i32 = arith.constant 16 : i32
    %8 = tpu.dynamic_rotate %1 by %c16_i32 dim 1 : vector<1x256xf32>, i32 -> vector<1x256xf32>
    %c1 = arith.constant 1 : index
    %c0_5 = arith.constant 0 : index
    %9 = vector.load %arg2[%c1, %c0_5] : memref<9x256xf32, #tpu.memory_space<vmem>>, vector<1x256xf32>
    %10 = arith.mulf %9, %8 : vector<1x256xf32>
    %11 = arith.addf %7, %10 : vector<1x256xf32>
    %c15_i32 = arith.constant 15 : i32
    %12 = tpu.dynamic_rotate %1 by %c15_i32 dim 1 : vector<1x256xf32>, i32 -> vector<1x256xf32>
    %c2 = arith.constant 2 : index
    %c0_6 = arith.constant 0 : index
    %13 = vector.load %arg2[%c2, %c0_6] : memref<9x256xf32, #tpu.memory_space<vmem>>, vector<1x256xf32>
    %14 = arith.mulf %13, %12 : vector<1x256xf32>
    %15 = arith.addf %11, %14 : vector<1x256xf32>
    %c1_i32 = arith.constant 1 : i32
    %16 = tpu.dynamic_rotate %1 by %c1_i32 dim 1 : vector<1x256xf32>, i32 -> vector<1x256xf32>
    %c3 = arith.constant 3 : index
    %c0_7 = arith.constant 0 : index
    %17 = vector.load %arg2[%c3, %c0_7] : memref<9x256xf32, #tpu.memory_space<vmem>>, vector<1x256xf32>
    %18 = arith.mulf %17, %16 : vector<1x256xf32>
    %19 = arith.addf %15, %18 : vector<1x256xf32>
    %c4 = arith.constant 4 : index
    %c0_8 = arith.constant 0 : index
    %20 = vector.load %arg2[%c4, %c0_8] : memref<9x256xf32, #tpu.memory_space<vmem>>, vector<1x256xf32>
    %21 = arith.mulf %20, %1 : vector<1x256xf32>
    %22 = arith.addf %19, %21 : vector<1x256xf32>
    %c255_i32 = arith.constant 255 : i32
    %23 = tpu.dynamic_rotate %1 by %c255_i32 dim 1 : vector<1x256xf32>, i32 -> vector<1x256xf32>
    %c5 = arith.constant 5 : index
    %c0_9 = arith.constant 0 : index
    %24 = vector.load %arg2[%c5, %c0_9] : memref<9x256xf32, #tpu.memory_space<vmem>>, vector<1x256xf32>
    %25 = arith.mulf %24, %23 : vector<1x256xf32>
    %26 = arith.addf %22, %25 : vector<1x256xf32>
    %c241_i32 = arith.constant 241 : i32
    %27 = tpu.dynamic_rotate %1 by %c241_i32 dim 1 : vector<1x256xf32>, i32 -> vector<1x256xf32>
    %c6 = arith.constant 6 : index
    %c0_10 = arith.constant 0 : index
    %28 = vector.load %arg2[%c6, %c0_10] : memref<9x256xf32, #tpu.memory_space<vmem>>, vector<1x256xf32>
    %29 = arith.mulf %28, %27 : vector<1x256xf32>
    %30 = arith.addf %26, %29 : vector<1x256xf32>
    %c240_i32 = arith.constant 240 : i32
    %31 = tpu.dynamic_rotate %1 by %c240_i32 dim 1 : vector<1x256xf32>, i32 -> vector<1x256xf32>
    %c7 = arith.constant 7 : index
    %c0_11 = arith.constant 0 : index
    %32 = vector.load %arg2[%c7, %c0_11] : memref<9x256xf32, #tpu.memory_space<vmem>>, vector<1x256xf32>
    %33 = arith.mulf %32, %31 : vector<1x256xf32>
    %34 = arith.addf %30, %33 : vector<1x256xf32>
    %c239_i32 = arith.constant 239 : i32
    %35 = tpu.dynamic_rotate %1 by %c239_i32 dim 1 : vector<1x256xf32>, i32 -> vector<1x256xf32>
    %c8 = arith.constant 8 : index
    %c0_12 = arith.constant 0 : index
    %36 = vector.load %arg2[%c8, %c0_12] : memref<9x256xf32, #tpu.memory_space<vmem>>, vector<1x256xf32>
    %37 = arith.mulf %36, %35 : vector<1x256xf32>
    %38 = arith.addf %34, %37 : vector<1x256xf32>
    %39 = arith.negf %38 : vector<1x256xf32>
    %40 = math.exp %39 : vector<1x256xf32>
    %cst_13 = arith.constant 1.000000e+00 : f32
    %41 = vector.broadcast %cst_13 : f32 to vector<1x256xf32>
    %42 = arith.addf %41, %40 : vector<1x256xf32>
    %43 = arith.divf %41, %42 : vector<1x256xf32>
    %c0_14 = arith.constant 0 : index
    %c0_15 = arith.constant 0 : index
    %c0_16 = arith.constant 0 : index
    %44 = vector.load %arg3[%c0_14, %c0_15, %c0_16] : memref<1x4x256xf32, #tpu.memory_space<vmem>>, vector<1x4x256xf32>
    %45 = vector.shape_cast %43 : vector<1x256xf32> to vector<1x1x256xf32>
    %46 = vector.broadcast %45 : vector<1x1x256xf32> to vector<1x4x256xf32>
    %47 = arith.mulf %44, %46 : vector<1x4x256xf32>
    %c0_17 = arith.constant 0 : index
    %c0_18 = arith.constant 0 : index
    %c0_19 = arith.constant 0 : index
    %48 = vector.load %arg4[%c0_17, %c0_18, %c0_19] : memref<1x4x256xf32, #tpu.memory_space<vmem>>, vector<1x4x256xf32>
    tpu.vector_store %arg4[%c0_17, %c0_18, %c0_19], %47 {strides = array<i32>} : memref<1x4x256xf32, #tpu.memory_space<vmem>>, vector<1x4x256xf32>,
    return
  }
  func.func @transform_0(%arg0: i32) -> i32 {
    %c0_i32 = arith.constant 0 : i32
    %c0_i32_0 = arith.constant 0 : i32
    return %c0_i32 : i32
  }
  func.func @transform_1(%arg0: i32) -> (i32, i32) {
    %c0_i32 = arith.constant 0 : i32
    %c0_i32_0 = arith.constant 0 : i32
    %c0_i32_1 = arith.constant 0 : i32
    return %c0_i32, %c0_i32_0 : i32, i32
  }
  func.func @transform_2(%arg0: i32) -> (i32, i32, i32) {
    %c0_i32 = arith.constant 0 : i32
    %c0_i32_0 = arith.constant 0 : i32
    %c0_i32_1 = arith.constant 0 : i32
    return %arg0, %c0_i32, %c0_i32_0 : i32, i32, i32
  }
  func.func @transform_3(%arg0: i32) -> (i32, i32, i32) {
    %c0_i32 = arith.constant 0 : i32
    %c0_i32_0 = arith.constant 0 : i32
    %c0_i32_1 = arith.constant 0 : i32
    return %arg0, %c0_i32, %c0_i32_0 : i32, i32, i32
  }
}

</mosaic_0001>

<llo_original>
// kernel: spatial_attention.1
$region0: #{spatial_attention.1}
  #allocation0 [shape = 'u32[]', space=smem, size = 0x4, offset = 0x4, fixed_abs, tag = 'smem constant byte address 0x4 - core index']
  #allocation1 [shape = 'u32[144,128]{1,0:T(1,128)}', space=vmem, size = 0x12000, scoped, tag = 'internal scratch']
  #allocation2 [shape = 'f32[1]{0:T(128)S(6)}', space=smem, size = 0x200, scoped, tag = 'scoped memory for spatial_attention.1']
  %s0 = inlined_call_operand.<no memory space> [shape: f32[1], index: 0, kind: input, shape index: {}]
  %s1 = inlined_call_operand.vmem [shape: f32[9,256], index: 1, kind: input, shape index: {}]
  %s2 = inlined_call_operand.vmem [shape: f32[2,4,256], index: 2, kind: input, shape index: {}]
  %s3 = inlined_call_operand.vmem [shape: f32[2,4,256], index: 3, kind: output, shape index: {}]
  %s4 = sld [smem:[#allocation0]]
  $region45: #{spatial_attention.1} parent=0
    _
  %s6 = ssub.s32 1, %s4
  %s7 = scalar_select 0, %s6, %s4
  %8 = sst [smem:[#allocation2]] %s0
  loop: start=0, step=1, limit=4
  $region2: #{spatial_attention.1} parent=0 // loop_pre_header
    _
  $region3: #{spatial_attention.1} parent=0 // loop_header
    %s10 = sphi 0, %s14
    %p11 = scmp.ge.s32.totalorder %s10, 4
    %s18 = sphi 0, %s18
    %s20 = sphi 0, %s18
    %s21 = sphi 0, %s20
    %s35 = sphi 0, %s21
    %s39 = sphi 0, %s39
    %s41 = sphi 0, %s39
    %s42 = sphi 0, %s41
    %s56 = sphi 0, %s42
    %s62 = sphi 0, %s64
    %s65 = sphi 0, %s62
    %s66 = sphi 0, %s65
    %s82 = sphi 0, %s66
    %s88 = sphi 0, %s90
    %s91 = sphi 0, %s88
    %s92 = sphi 0, %s91
    %s108 = sphi 0, %s92
  $region4: #{spatial_attention.1} parent=0 // loop_header_branch
    %13 = sbr.rel (%p11) target = $region8
  $region5: #{spatial_attention.1} parent=0 // loop_body
    %s15 = ssub.s32 %s10, 1
    %s16 = ssub.s32 %s10, 2
    %s17 = sadd.s32 %s10, 1
    %s19 = sadd.s32 %s18, 1
    %p22 = scmp.eq.s32.totalorder %s10, 1
    %p23 = scmp.ne.s32.totalorder %s18, %s20
    %p24 = scmp.eq.s32.totalorder %s10, 0
    %p25 = por %p23, %p24
    %p26 = scmp.ne.s32.totalorder %s18, %s20
    %p27 = scmp.eq.s32.totalorder %s15, 1
    %p28 = por %p26, %p27
    %p29 = scmp.ne.s32.totalorder %s20, %s21
    %p30 = scmp.eq.s32.totalorder %s15, 0
    %p31 = por %p29, %p30
    %p32 = scmp.ne.s32.totalorder %s20, %s21
    %p33 = scmp.eq.s32.totalorder %s16, 1
    %p34 = por %p32, %p33
    %p36 = scmp.ne.s32.totalorder %s21, %s35
    %p37 = scmp.eq.s32.totalorder %s16, 0
    %p38 = por %p36, %p37
    %s40 = sadd.s32 %s39, 1
    %p43 = scmp.eq.s32.totalorder %s10, 1
    %p44 = scmp.ne.s32.totalorder %s39, %s41
    %p45 = scmp.eq.s32.totalorder %s10, 0
    %p46 = por %p44, %p45
    %p47 = scmp.ne.s32.totalorder %s39, %s41
    %p48 = scmp.eq.s32.totalorder %s15, 1
    %p49 = por %p47, %p48
    %p50 = scmp.ne.s32.totalorder %s41, %s42
    %p51 = scmp.eq.s32.totalorder %s15, 0
    %p52 = por %p50, %p51
    %p53 = scmp.ne.s32.totalorder %s41, %s42
    %p54 = scmp.eq.s32.totalorder %s16, 1
    %p55 = por %p53, %p54
    %p57 = scmp.ne.s32.totalorder %s42, %s56
    %p58 = scmp.eq.s32.totalorder %s16, 0
    %p59 = por %p57, %p58
    %s60 = ssub.s32 %s10, %s17
    %p61 = scmp.eq.s32.totalorder %s60, 0
    %s63 = sadd.s32 %s62, 1
    %s64 = scalar_select %p61, %s62, %s63
    %p67 = pneg %p61
    %p68 = scmp.eq.s32.totalorder %s10, 1
    %p69 = por %p67, %p68
    %p70 = scmp.ne.s32.totalorder %s62, %s65
    %p71 = scmp.eq.s32.totalorder %s10, 0
    %p72 = por %p70, %p71
    %p73 = scmp.ne.s32.totalorder %s62, %s65
    %p74 = scmp.eq.s32.totalorder %s15, 1
    %p75 = por %p73, %p74
    %p76 = scmp.ne.s32.totalorder %s65, %s66
    %p77 = scmp.eq.s32.totalorder %s15, 0
    %p78 = por %p76, %p77
    %p79 = scmp.ne.s32.totalorder %s65, %s66
    %p80 = scmp.eq.s32.totalorder %s16, 1
    %p81 = por %p79, %p80
    %p83 = scmp.ne.s32.totalorder %s66, %s82
    %p84 = scmp.eq.s32.totalorder %s16, 0
    %p85 = por %p83, %p84
    %s86 = ssub.s32 %s10, %s17
    %p87 = scmp.eq.s32.totalorder %s86, 0
    %s89 = sadd.s32 %s88, 1
    %s90 = scalar_select %p87, %s88, %s89
    %p93 = pneg %p87
    %p94 = scmp.eq.s32.totalorder %s10, 1
    %p95 = por %p93, %p94
    %p96 = scmp.ne.s32.totalorder %s88, %s91
    %p97 = scmp.eq.s32.totalorder %s10, 0
    %p98 = por %p96, %p97
    %p99 = scmp.ne.s32.totalorder %s88, %s91
    %p100 = scmp.eq.s32.totalorder %s15, 1
    %p101 = por %p99, %p100
    %p102 = scmp.ne.s32.totalorder %s91, %s92
    %p103 = scmp.eq.s32.totalorder %s15, 0
    %p104 = por %p102, %p103
    %p105 = scmp.ne.s32.totalorder %s91, %s92
    %p106 = scmp.eq.s32.totalorder %s16, 1
    %p107 = por %p105, %p106
    %p109 = scmp.ne.s32.totalorder %s92, %s108
    %p110 = scmp.eq.s32.totalorder %s16, 0
    %p111 = por %p109, %p110
    %p112 = scmp.le.s32.totalorder 1, %s10
    %p113 = scmp.lt.s32.totalorder %s10, 3
    %p114 = pnand %p112, %p113
    %p115 = pneg %p114
    // Predicated region
    $region9: #{spatial_attention.1} parent=5 // pred_check
      _
    $region10: #{spatial_attention.1} parent=5 // pred_check_branch
      %117 = sbr.rel (%p114) target = $region12
    $region11: #{spatial_attention.1} parent=5 // pred_region
      %s118 = ssub.s32 %s10, 1
      // Predicated region
      $region13: #{spatial_attention.1} parent=11 // pred_check
        %p119 = pneg %p31
      $region14: #{spatial_attention.1} parent=11 // pred_check_branch
        %121 = sbr.rel (%p119) target = $region16
      $region15: #{spatial_attention.1} parent=11 // pred_region
        _
      $region16: #{spatial_attention.1} parent=11 // pred_fallthru
        _
      // Predicated region
      $region17: #{spatial_attention.1} parent=11 // pred_check
        %p122 = pneg %p52
      $region18: #{spatial_attention.1} parent=11 // pred_check_branch
        %124 = sbr.rel (%p122) target = $region20
      $region19: #{spatial_attention.1} parent=11 // pred_region
        _
      $region20: #{spatial_attention.1} parent=11 // pred_fallthru
        _
    $region12: #{spatial_attention.1} parent=5 // pred_fallthru
      _
    %p125 = scmp.lt.s32.totalorder %s10, 2
    // Predicated region
    $region21: #{spatial_attention.1} parent=5 // pred_check
      %p126 = pneg %p125
    $region22: #{spatial_attention.1} parent=5 // pred_check_branch
      %128 = sbr.rel (%p126) target = $region24
    $region23: #{spatial_attention.1} parent=5 // pred_region
      // Predicated region
      $region25: #{spatial_attention.1} parent=23 // pred_check
        %p129 = pneg %p72
      $region26: #{spatial_attention.1} parent=23 // pred_check_branch
        %131 = sbr.rel (%p129) target = $region28
      $region27: #{spatial_attention.1} parent=23 // pred_region
        %p132 = scmp.lt.s32.totalorder %s10, 1
        %s133 = scalar_select %p132, %s10, 1
        %s134 = smul.addr %s133, 2
        %s135 = smul.addr %s134, 4
        %s136 = scalar_lea.vmem %s2, %s135
      $region28: #{spatial_attention.1} parent=23 // pred_fallthru
        _
    $region24: #{spatial_attention.1} parent=5 // pred_fallthru
      _
    %p137 = scmp.le.s32.totalorder 1, %s10
    %p138 = scmp.lt.s32.totalorder %s10, 3
    %p139 = pnand %p137, %p138
    %p140 = pneg %p139
    // Predicated region
    $region29: #{spatial_attention.1} parent=5 // pred_check
      _
    $region30: #{spatial_attention.1} parent=5 // pred_check_branch
      %142 = sbr.rel (%p139) target = $region32
    $region31: #{spatial_attention.1} parent=5 // pred_region
      %s143 = ssub.s32 %s10, 1
      %p144 = pneg %p31
      %p145 = pneg %p28
      %p146 = pneg %p52
      %p147 = pneg %p49
      %p148 = scmp.lt.s32.totalorder %s15, 1
      %s149 = scalar_select %p148, %s15, 1
      %s150 = smul.addr %s149, 2
      %s151 = smul.addr %s150, 4
      %s152 = scalar_lea.vmem %s2, %s151
      %p153 = pneg %p78
      %p154 = pneg %p75
      %p155 = pneg %p104
      %p156 = pneg %p101
      %p157 = scmp.lt.s32.totalorder %s15, 1
      %s158 = scalar_select %p157, %s15, 1
      %s159 = smul.addr %s158, 2
      %s160 = smul.addr %s159, 4
      %s161 = scalar_lea.vmem %s3, %s160
      %p162 = scmp.lt.s32.totalorder %s15, 1
      %s163 = scalar_select %p162, %s15, 1
      %s164 = smul.addr %s163, 2
      %s165 = smul.addr %s164, 4
      %s166 = scalar_lea.vmem %s2, %s165
      %p167 = scmp.lt.s32.totalorder %s15, 1
      %s168 = scalar_select %p167, %s15, 1
      %s169 = smul.addr %s168, 2
      %s170 = smul.addr %s169, 4
      %s171 = scalar_lea.vmem %s3, %s170
      %v172 = vld [vmem:[%s166] sm:$0xff]
      %v174 = vcombine.high %v172, %v172
      %vm176 = vcmask 1043456
      %v177 = vsel %vm176, %v172, 0.0
      %v178 = vrot.slane %v177, 4
      %v179 = vadd.f32 %v177, %v178
      %v180 = vrot.slane %v179, 2
      %v181 = vadd.f32 %v179, %v180
      %v182 = vrot.slane %v181, 1
      %v183 = vadd.f32 %v181, %v182
      %v184 = vsel %vm176, %v174, 0.0
      %v185 = vrot.slane %v184, 4
      %v186 = vadd.f32 %v184, %v185
      %v187 = vrot.slane %v186, 2
      %v188 = vadd.f32 %v186, %v187
      %v189 = vrot.slane %v188, 1
      %v190 = vadd.f32 %v188, %v189
      %s191 = sld [smem:[#allocation2]]
      %v192 = vstv %s191
      %193 = vrot.lane.b32.xlu0 %v183, 17
      %v194 = vpop.permute.xlu0 %193
      %195 = vrot.lane.b32.xlu0 %v190, 17
      %v196 = vpop.permute.xlu0 %195
      %v197 = vlaneseq
      %v198 = vand.u32 %v197, 127
      %vm199 = vcmp.lt.s32.totalorder %v198, 17
      %v200 = vsel %vm199, %v194, %v196
      %v201 = vsel %vm199, %v196, %v194
      %v202 = vld [vmem:[%s1] ss:$8 sm:$0x3]
      %v205 = vcombine.low %v201, %v200
      %v207 = vunpack.c.l.s4 1966171168
      %v208 = vunpack.c.0.s8 %v207
      %v209 = vlaneseq
      %v210 = vshrl.u32 %v209, 7
      %v211 = vsub.s32 %v208, %v210
      %v212 = vrot.slane %v205, %v211
      %v214 = vunpack.c.l.s4 1966171168
      %v215 = vunpack.c.0.s8 %v214
      %v216 = vlaneseq
      %v217 = vshrl.u32 %v216, 7
      %v218 = vsub.s32 %v215, %v217
      %v219 = vrot.slane %v212, %v218
      %v221 = vmul.f32 %v202, %v219
      %v222 = vadd.f32 %v192, %v221
      %223 = vrot.lane.b32.xlu0 %v183, 16
      %v224 = vpop.permute.xlu0 %223
      %225 = vrot.lane.b32.xlu0 %v190, 16
      %v226 = vpop.permute.xlu0 %225
      %vm227 = vcmp.lt.s32.totalorder %v198, 16
      %v228 = vsel %vm227, %v224, %v226
      %v229 = vsel %vm227, %v226, %v224
      %s230 = scalar_lea.vmem %s1, 1
      %v231 = vld [vmem:[%s230] ss:$8 sm:$0x3]
      %v234 = vcombine.low %v229, %v228
      %v236 = vunpack.c.l.s4 1966171168
      %v237 = vunpack.c.0.s8 %v236
      %v238 = vlaneseq
      %v239 = vshrl.u32 %v238, 7
      %v240 = vsub.s32 %v237, %v239
      %v241 = vrot.slane %v234, %v240
      %v243 = vunpack.c.l.s4 1966171168
      %v244 = vunpack.c.0.s8 %v243
      %v245 = vlaneseq
      %v246 = vshrl.u32 %v245, 7
      %v247 = vsub.s32 %v244, %v246
      %v248 = vrot.slane %v241, %v247
      %v250 = vmul.f32 %v231, %v248
      %v251 = vadd.f32 %v222, %v250
      %252 = vrot.lane.b32.xlu0 %v183, 15
      %v253 = vpop.permute.xlu0 %252
      %254 = vrot.lane.b32.xlu0 %v190, 15
      %v255 = vpop.permute.xlu0 %254
      %vm256 = vcmp.lt.s32.totalorder %v198, 15
      %v257 = vsel %vm256, %v253, %v255
      %v258 = vsel %vm256, %v255, %v253
      %s259 = scalar_lea.vmem %s1, 2
      %v260 = vld [vmem:[%s259] ss:$8 sm:$0x3]
      %v263 = vcombine.low %v258, %v257
      %v265 = vunpack.c.l.s4 1966171168
      %v266 = vunpack.c.0.s8 %v265
      %v267 = vlaneseq
      %v268 = vshrl.u32 %v267, 7
      %v269 = vsub.s32 %v266, %v268
      %v270 = vrot.slane %v263, %v269
      %v272 = vunpack.c.l.s4 1966171168
      %v273 = vunpack.c.0.s8 %v272
      %v274 = vlaneseq
      %v275 = vshrl.u32 %v274, 7
      %v276 = vsub.s32 %v273, %v275
      %v277 = vrot.slane %v270, %v276
      %v279 = vmul.f32 %v260, %v277
      %v280 = vadd.f32 %v251, %v279
      %281 = vrot.lane.b32.xlu0 %v183, 1
      %v282 = vpop.permute.xlu0 %281
      %283 = vrot.lane.b32.xlu0 %v190, 1
      %v284 = vpop.permute.xlu0 %283
      %vm285 = vcmp.lt.s32.totalorder %v198, 1
      %v286 = vsel %vm285, %v282, %v284
      %v287 = vsel %vm285, %v284, %v282
      %s288 = scalar_lea.vmem %s1, 3
      %v289 = vld [vmem:[%s288] ss:$8 sm:$0x3]
      %v292 = vcombine.low %v287, %v286
      %v294 = vunpack.c.l.s4 1966171168
      %v295 = vunpack.c.0.s8 %v294
      %v296 = vlaneseq
      %v297 = vshrl.u32 %v296, 7
      %v298 = vsub.s32 %v295, %v297
      %v299 = vrot.slane %v292, %v298
      %v301 = vunpack.c.l.s4 1966171168
      %v302 = vunpack.c.0.s8 %v301
      %v303 = vlaneseq
      %v304 = vshrl.u32 %v303, 7
      %v305 = vsub.s32 %v302, %v304
      %v306 = vrot.slane %v299, %v305
      %v308 = vmul.f32 %v289, %v306
      %v309 = vadd.f32 %v280, %v308
      %s310 = scalar_lea.vmem %s1, 4
      %v311 = vld [vmem:[%s310] ss:$8 sm:$0x3]
      %v314 = vcombine.low %v183, %v190
      %v316 = vunpack.c.l.s4 1966171168
      %v317 = vunpack.c.0.s8 %v316
      %v318 = vlaneseq
      %v319 = vshrl.u32 %v318, 7
      %v320 = vsub.s32 %v317, %v319
      %v321 = vrot.slane %v314, %v320
      %v323 = vunpack.c.l.s4 1966171168
      %v324 = vunpack.c.0.s8 %v323
      %v325 = vlaneseq
      %v326 = vshrl.u32 %v325, 7
      %v327 = vsub.s32 %v324, %v326
      %v328 = vrot.slane %v321, %v327
      %v330 = vmul.f32 %v311, %v328
      %v331 = vadd.f32 %v309, %v330
      %332 = vrot.lane.b32.xlu0 %v183, 127
      %v333 = vpop.permute.xlu0 %332
      %334 = vrot.lane.b32.xlu0 %v190, 127
      %v335 = vpop.permute.xlu0 %334
      %vm336 = vcmp.lt.s32.totalorder %v198, 127
      %v337 = vsel %vm336, %v333, %v335
      %v338 = vsel %vm336, %v335, %v333
      %s339 = scalar_lea.vmem %s1, 5
      %v340 = vld [vmem:[%s339] ss:$8 sm:$0x3]
      %v343 = vcombine.low %v337, %v338
      %v345 = vunpack.c.l.s4 1966171168
      %v346 = vunpack.c.0.s8 %v345
      %v347 = vlaneseq
      %v348 = vshrl.u32 %v347, 7
      %v349 = vsub.s32 %v346, %v348
      %v350 = vrot.slane %v343, %v349
      %v352 = vunpack.c.l.s4 1966171168
      %v353 = vunpack.c.0.s8 %v352
      %v354 = vlaneseq
      %v355 = vshrl.u32 %v354, 7
      %v356 = vsub.s32 %v353, %v355
      %v357 = vrot.slane %v350, %v356
      %v359 = vmul.f32 %v340, %v357
      %v360 = vadd.f32 %v331, %v359
      %361 = vrot.lane.b32.xlu0 %v183, 113
      %v362 = vpop.permute.xlu0 %361
      %363 = vrot.lane.b32.xlu0 %v190, 113
      %v364 = vpop.permute.xlu0 %363
      %vm365 = vcmp.lt.s32.totalorder %v198, 113
      %v366 = vsel %vm365, %v362, %v364
      %v367 = vsel %vm365, %v364, %v362
      %s368 = scalar_lea.vmem %s1, 6
      %v369 = vld [vmem:[%s368] ss:$8 sm:$0x3]
      %v372 = vcombine.low %v366, %v367
      %v374 = vunpack.c.l.s4 1966171168
      %v375 = vunpack.c.0.s8 %v374
      %v376 = vlaneseq
      %v377 = vshrl.u32 %v376, 7
      %v378 = vsub.s32 %v375, %v377
      %v379 = vrot.slane %v372, %v378
      %v381 = vunpack.c.l.s4 1966171168
      %v382 = vunpack.c.0.s8 %v381
      %v383 = vlaneseq
      %v384 = vshrl.u32 %v383, 7
      %v385 = vsub.s32 %v382, %v384
      %v386 = vrot.slane %v379, %v385
      %v388 = vmul.f32 %v369, %v386
      %v389 = vadd.f32 %v360, %v388
      %390 = vrot.lane.b32.xlu0 %v183, 112
      %v391 = vpop.permute.xlu0 %390
      %392 = vrot.lane.b32.xlu0 %v190, 112
      %v393 = vpop.permute.xlu0 %392
      %vm394 = vcmp.lt.s32.totalorder %v198, 112
      %v395 = vsel %vm394, %v391, %v393
      %v396 = vsel %vm394, %v393, %v391
      %s397 = scalar_lea.vmem %s1, 7
      %v398 = vld [vmem:[%s397] ss:$8 sm:$0x3]
      %v401 = vcombine.low %v395, %v396
      %v403 = vunpack.c.l.s4 1966171168
      %v404 = vunpack.c.0.s8 %v403
      %v405 = vlaneseq
      %v406 = vshrl.u32 %v405, 7
      %v407 = vsub.s32 %v404, %v406
      %v408 = vrot.slane %v401, %v407
      %v410 = vunpack.c.l.s4 1966171168
      %v411 = vunpack.c.0.s8 %v410
      %v412 = vlaneseq
      %v413 = vshrl.u32 %v412, 7
      %v414 = vsub.s32 %v411, %v413
      %v415 = vrot.slane %v408, %v414
      %v417 = vmul.f32 %v398, %v415
      %v418 = vadd.f32 %v389, %v417
      %419 = vrot.lane.b32.xlu0 %v183, 111
      %v420 = vpop.permute.xlu0 %419
      %421 = vrot.lane.b32.xlu0 %v190, 111
      %v422 = vpop.permute.xlu0 %421
      %vm423 = vcmp.lt.s32.totalorder %v198, 111
      %v424 = vsel %vm423, %v420, %v422
      %v425 = vsel %vm423, %v422, %v420
      %s426 = scalar_lea.vmem %s1, 16
      %v427 = vld [vmem:[%s426] ss:$8 sm:$0x3]
      %v430 = vcombine.low %v424, %v425
      %v432 = vunpack.c.l.s4 1966171168
      %v433 = vunpack.c.0.s8 %v432
      %v434 = vlaneseq
      %v435 = vshrl.u32 %v434, 7
      %v436 = vsub.s32 %v433, %v435
      %v437 = vrot.slane %v430, %v436
      %v439 = vunpack.c.l.s4 1966171168
      %v440 = vunpack.c.0.s8 %v439
      %v441 = vlaneseq
      %v442 = vshrl.u32 %v441, 7
      %v443 = vsub.s32 %v440, %v442
      %v444 = vrot.slane %v437, %v443
      %v446 = vmul.f32 %v427, %v444
      %v447 = vadd.f32 %v418, %v446
      %v448 = vxor.u32 %v447, 2147483648
      %v449 = vmul.f32 %v448, 1.442695
      %v450 = vpow.pop %v449
      %v451 = vadd.f32 %v450, 1.0
      %v452 = vrcp.pop %v451
      %v453 = vmul.f32 1.0, %v452
      %v455 = vlaneseq
      %v456 = vshrl.u32 %v455, 7
      %v457 = vsub.s32 0, %v456
      %v458 = vrot.slane %v453, %v457
      %v459 = vlaneseq
      %v460 = vshrl.u32 %v459, 7
      %v461 = vsub.s32 1, %v460
      %v462 = vrot.slane %v453, %v461
      %v463 = vcombine.low %v458, %v462
      %v465 = vmul.f32 %v172, %v463
      %466 = vst [vmem:[%s171] sm:$0xff] %v465
      %p467 = scmp.lt.s32.totalorder %s15, 1
      %s468 = scalar_select %p467, %s15, 1
      %s469 = smul.addr %s468, 2
      %s470 = smul.addr %s469, 4
      %s471 = scalar_lea.vmem %s3, %s470
      // Predicated region
      $region33: #{spatial_attention.1} parent=31 // pred_check
        %p472 = pneg %p101
      $region34: #{spatial_attention.1} parent=31 // pred_check_branch
        %474 = sbr.rel (%p472) target = $region36
      $region35: #{spatial_attention.1} parent=31 // pred_region
        _
      $region36: #{spatial_attention.1} parent=31 // pred_fallthru
        _
    $region32: #{spatial_attention.1} parent=5 // pred_fallthru
      _
    %p475 = scmp.le.s32.totalorder 2, %s10
    // Predicated region
    $region37: #{spatial_attention.1} parent=5 // pred_check
      %p476 = pneg %p475
    $region38: #{spatial_attention.1} parent=5 // pred_check_branch
      %478 = sbr.rel (%p476) target = $region40
    $region39: #{spatial_attention.1} parent=5 // pred_region
      %s479 = ssub.s32 %s10, 2
      // Predicated region
      $region41: #{spatial_attention.1} parent=39 // pred_check
        %p480 = pneg %p107
      $region42: #{spatial_attention.1} parent=39 // pred_check_branch
        %482 = sbr.rel (%p480) target = $region44
      $region43: #{spatial_attention.1} parent=39 // pred_region
        %p483 = scmp.lt.s32.totalorder %s16, 1
        %s484 = scalar_select %p483, %s16, 1
        %s485 = smul.addr %s484, 2
        %s486 = smul.addr %s485, 4
        %s487 = scalar_lea.vmem %s3, %s486
      $region44: #{spatial_attention.1} parent=39 // pred_fallthru
        _
    $region40: #{spatial_attention.1} parent=5 // pred_fallthru
      _
  $region6: #{spatial_attention.1} parent=0 // loop_footer
    %s14 = sadd.s32 1, %s10
  $region7: #{spatial_attention.1} parent=0 // loop_footer_branch
    %9 = sbr.rel target = $region3
  $region8: #{spatial_attention.1} parent=0 // loop_exit
    _

</llo_original>
